<compile_context>
chip_gen: v7x
topology: tpu7x:2x2x1
jax: 0.10.0
libtpu: 0.0.40
codegen_flags: <defaults>
</compile_context>

<pallas_src>
import numpy as np
import jax
import jax.numpy as jnp
from jax.experimental import pallas as pl
from jax.experimental.pallas import tpu as pltpu


def make_kernel_np(k):
    """Replicates make_kernel from the PyTorch module with numpy."""
    k = np.asarray(k, dtype=np.float32)
    if k.ndim == 1:
        k = k[None, :] * k[:, None]
    k = k / k.sum()
    return k


def _round_up(v, m):
    return -(-v // m) * m


def _vmem_budget():
    """Generation-aware scoped-VMEM limit and per-grid-step budget."""
    cap = 64 * 1024 * 1024  # conservative default (v7x physical VMEM per TC)
    try:
        info = pltpu.get_tpu_info()
        cap = int(getattr(info, "vmem_capacity_bytes", cap))
    except Exception:
        pass
    # ~96 MiB on 128 MiB parts (v5e/v6e), ~48 MiB on v7x.
    vmem_limit = min(100 * 1024 * 1024, (cap * 3) // 4)
    # Half for the per-step working set: headroom for compiler temporaries.
    return vmem_limit, vmem_limit // 2


def _choose_c_tile(C, N, bytes_per_channel, step_budget):
    """Largest divisor of C whose per-step footprint fits the VMEM budget."""
    divisors = [d for d in range(1, C + 1) if C % d == 0]
    fitting = [d for d in divisors if d * bytes_per_channel <= step_budget] or [1]
    c_tile = fitting[-1]
    # v7x shards "parallel" grid axes across 2 TensorCores: when N == 1 make
    # sure there are at least 2 channel blocks so neither core idles.
    if N == 1 and C // c_tile < 2:
        smaller = [d for d in fitting if d < C]
        if smaller:
            c_tile = smaller[-1]
    return c_tile


def blur_pallas(x, kernel_1d=(1, 3, 3, 1), pad=(2, 1), upsample_factor=1):
    """x: NCHW (f32 or bf16). Returns upfirdn2d(x, make_kernel(kernel_1d), pad=pad), NCHW."""
    k_in = np.asarray(kernel_1d, dtype=np.float32)
    separable = (k_in.ndim == 1)
    k2d = make_kernel_np(k_in)
    if upsample_factor > 1:
        k2d = k2d * (upsample_factor ** 2)
    # upfirdn2d applies a flipped kernel (true convolution).
    k2d_f = np.ascontiguousarray(k2d[::-1, ::-1])
    kh, kw = k2d_f.shape
    if separable:
        s = float(k_in.sum())
        k1f = k_in[::-1]
        taps_w = [float(v) / s for v in k1f]                            # kw taps
        taps_h = [float(v) * (upsample_factor ** 2) / s for v in k1f]   # kh taps
    taps_2d = [[float(k2d_f[i, j]) for j in range(kw)] for i in range(kh)]

    N, C, H, W = x.shape
    p0, p1 = pad
    Hp, Wp = H + p0 + p1, W + p0 + p1
    Ho, Wo = Hp - kh + 1, Wp - kw + 1
    assert Ho > 0 and Wo > 0 and Hp > 0 and Wp > 0, "pad too small for kernel size"

    # Static interior-placement math (handles negative pads = crop, like upfirdn2d).
    src_h0, src_h1 = max(0, -p0), H - max(0, -p1)
    src_w0, src_w1 = max(0, -p0), W - max(0, -p1)
    dst_h0, dst_w0 = max(0, p0), max(0, p0)
    n_h, n_w = src_h1 - src_h0, src_w1 - src_w0
    assert n_h > 0 and n_w > 0, "crop removes the whole input"

    # Padded plane rounded up to (sublane, lane) multiples so pltpu.roll shifts
    # are vreg-aligned; the round-up region never feeds the [0:Ho, 0:Wo] output.
    Hp_r, Wp_r = _round_up(Hp, 8), _round_up(Wp, 128)

    f32 = jnp.float32
    pad_dtype = jnp.bfloat16 if x.dtype == jnp.bfloat16 else f32

    itemsize = x.dtype.itemsize
    pad_itemsize = jnp.dtype(pad_dtype).itemsize
    # Per-channel, per-grid-step VMEM: double-buffered in/out blocks + pad
    # scratch + ~3 full f32 planes of compute temporaries (mid / rolled / out).
    bytes_per_channel = (2 * (H * W + Ho * Wo) * itemsize
                         + Hp_r * Wp_r * pad_itemsize
                         + 3 * Hp_r * Wp_r * 4)
    vmem_limit, step_budget = _vmem_budget()
    c_tile = _choose_c_tile(C, N, bytes_per_channel, step_budget)
    # TODO(synk): if even a single channel's full plane exceeds the VMEM budget
    # (spatial sizes well beyond 1024x1024), an H-tiled variant with a (kh-1)-row
    # halo via memory_space=pl.ANY + pltpu.make_async_copy is required.

    def fir_kernel(x_ref, o_ref, pad_ref):
        # x_ref  : (1, c_tile, H, W)    NCHW input block  (W on lanes, H on sublanes)
        # o_ref  : (1, c_tile, Ho, Wo)  NCHW output block
        # pad_ref: (c_tile, Hp_r, Wp_r) zero-padded plane scratch

        # ---- fused zero padding: only thin borders are zeroed, then interior copy ----
        if dst_h0 > 0:
            pad_ref[:, 0:dst_h0, :] = jnp.zeros((c_tile, dst_h0, Wp_r), pad_dtype)
        if dst_h0 + n_h < Hp_r:
            pad_ref[:, dst_h0 + n_h:Hp_r, :] = jnp.zeros(
                (c_tile, Hp_r - dst_h0 - n_h, Wp_r), pad_dtype)
        if dst_w0 > 0:
            pad_ref[:, dst_h0:dst_h0 + n_h, 0:dst_w0] = jnp.zeros(
                (c_tile, n_h, dst_w0), pad_dtype)
        if dst_w0 + n_w < Wp_r:
            pad_ref[:, dst_h0:dst_h0 + n_h, dst_w0 + n_w:Wp_r] = jnp.zeros(
                (c_tile, n_h, Wp_r - dst_w0 - n_w), pad_dtype)
        pad_ref[:, dst_h0:dst_h0 + n_h, dst_w0:dst_w0 + n_w] = (
            x_ref[0, :, src_h0:src_h1, src_w0:src_w1].astype(pad_dtype))

        # Collapse (c_tile, Hp_r) -> rows: tile-preserving reshape (Hp_r % 8 == 0),
        # so both tap shifts become canonical 2-D sublane/lane rolls on the XLU.
        R = c_tile * Hp_r
        p = pad_ref[...].reshape(R, Wp_r)

        def shift_w(arr, j):   # out[., w] <- arr[., w + j]   (lane roll, XLU)
            r = arr if j == 0 else pltpu.roll(arr, Wp_r - j, 1)
            return r.astype(f32)

        def shift_h(arr, i):   # out[m, .] <- arr[m + i, .]   (sublane roll, XLU)
            return arr if i == 0 else pltpu.roll(arr, R - i, 0)

        if separable:
            # Horizontal 1-D pass (kw taps), then vertical 1-D pass (kh taps):
            # 2*(kh) madds/element instead of kh*kw.
            mid = taps_w[0] * shift_w(p, 0)
            for j in range(1, kw):
                mid = mid + taps_w[j] * shift_w(p, j)
            out2 = taps_h[0] * mid
            for i in range(1, kh):
                out2 = out2 + taps_h[i] * shift_h(mid, i)
        else:
            # Generic non-separable 2-D kernel fallback (kh*kw taps).
            pf = p.astype(f32)
            out2 = None
            for i in range(kh):
                row = shift_h(pf, i)
                for j in range(kw):
                    term = taps_2d[i][j] * (row if j == 0 else pltpu.roll(row, Wp_r - j, 1))
                    out2 = term if out2 is None else out2 + term

        # Rolled positions that wrapped (h >= Ho or w >= Wo) are discarded here.
        out = out2.reshape(c_tile, Hp_r, Wp_r)[:, 0:Ho, 0:Wo]
        o_ref[0] = out.astype(o_ref.dtype)

    return pl.pallas_call(
        fir_kernel,
        out_shape=jax.ShapeDtypeStruct((N, C, Ho, Wo), x.dtype),
        grid=(N, C // c_tile),
        in_specs=[pl.BlockSpec((1, c_tile, H, W), lambda n, c: (n, c, 0, 0))],
        out_specs=pl.BlockSpec((1, c_tile, Ho, Wo), lambda n, c: (n, c, 0, 0)),
        scratch_shapes=[pltpu.VMEM((c_tile, Hp_r, Wp_r), pad_dtype)],
        compiler_params=pltpu.CompilerParams(
            dimension_semantics=("parallel", "parallel"),
            vmem_limit_bytes=vmem_limit),
    )(x)


def blur_reference(x, kernel_1d=(1, 3, 3, 1), pad=(2, 1), upsample_factor=1):
    """Pure-JAX depthwise-conv reference for correctness checking."""
    k = make_kernel_np(kernel_1d)
    if upsample_factor > 1:
        k = k * (upsample_factor ** 2)
    kf = np.ascontiguousarray(k[::-1, ::-1])
    N, C, H, W = x.shape
    p0, p1 = pad
    xp = jnp.pad(x, ((0, 0), (0, 0), (p0, p1), (p0, p1)))
    w = jnp.asarray(kf, x.dtype)[None, None]            # (1, 1, kh, kw)
    w = jnp.tile(w, (C, 1, 1, 1))                       # depthwise
    return jax.lax.conv_general_dilated(
        xp, w, window_strides=(1, 1), padding="VALID",
        dimension_numbers=("NCHW", "OIHW", "NCHW"),
        feature_group_count=C,
    )


if __name__ == "__main__":
    key = jax.random.PRNGKey(0)
    N, C, H, W = 2, 4, 16, 16
    x = jax.random.normal(key, (N, C, H, W), dtype=jnp.float32)

    kernel_1d = (1, 3, 3, 1)   # standard StyleGAN2 blur kernel
    pad = (2, 1)               # typical pad for the 4-tap blur (keeps spatial size)

    out = jax.block_until_ready(blur_pallas(x, kernel_1d=kernel_1d, pad=pad))
    ref = jax.block_until_ready(blur_reference(x, kernel_1d=kernel_1d, pad=pad))
    assert out.shape == ref.shape == (N, C, H, W), (out.shape, ref.shape)
    np.testing.assert_allclose(np.asarray(out), np.asarray(ref), rtol=1e-5, atol=1e-5)

    print("KERNEL_OK")
</pallas_src>

<mosaic_0001>
module attributes {stable_mosaic.version = 11 : i64} {
  func.func @fir_kernel(%arg0: i32, %arg1: i32, %arg2: memref<1x4x16x16xf32, #tpu.memory_space<vmem>>, %arg3: memref<1x4x16x16xf32, #tpu.memory_space<vmem>>, %arg4: memref<4x24x128xf32, #tpu.memory_space<vmem>>) attributes {dimension_semantics = [#tpu.dimension_semantics<parallel>, #tpu.dimension_semantics<parallel>], iteration_bounds = array<i64: 2, 1>, scalar_prefetch = 0 : i64, scratch_operands = 1 : i64, tpu.core_type = #tpu.core_type<tc>, window_params = [{transform_indices = @transform_0, window_bounds = array<i64: 1, 4, 16, 16>}, {transform_indices = @transform_1, window_bounds = array<i64: 1, 4, 16, 16>}]} {
    %cst = arith.constant 0.000000e+00 : f32
    %0 = vector.broadcast %cst : f32 to vector<4x2x128xf32>
    %c0 = arith.constant 0 : index
    %c0_0 = arith.constant 0 : index
    %c0_1 = arith.constant 0 : index
    %1 = vector.load %arg4[%c0, %c0_0, %c0_1] : memref<4x24x128xf32, #tpu.memory_space<vmem>>, vector<4x2x128xf32>
    tpu.vector_store %arg4[%c0, %c0_0, %c0_1], %0 {strides = array<i32>} : memref<4x24x128xf32, #tpu.memory_space<vmem>>, vector<4x2x128xf32>,
    %cst_2 = arith.constant 0.000000e+00 : f32
    %2 = vector.broadcast %cst_2 : f32 to vector<4x6x128xf32>
    %c0_3 = arith.constant 0 : index
    %c18 = arith.constant 18 : index
    %c0_4 = arith.constant 0 : index
    %3 = vector.load %arg4[%c0_3, %c18, %c0_4] : memref<4x24x128xf32, #tpu.memory_space<vmem>>, vector<4x6x128xf32>
    tpu.vector_store %arg4[%c0_3, %c18, %c0_4], %2 {strides = array<i32>} : memref<4x24x128xf32, #tpu.memory_space<vmem>>, vector<4x6x128xf32>,
    %cst_5 = arith.constant 0.000000e+00 : f32
    %4 = vector.broadcast %cst_5 : f32 to vector<4x16x2xf32>
    %c0_6 = arith.constant 0 : index
    %c2 = arith.constant 2 : index
    %c0_7 = arith.constant 0 : index
    %5 = vector.load %arg4[%c0_6, %c2, %c0_7] : memref<4x24x128xf32, #tpu.memory_space<vmem>>, vector<4x16x2xf32>
    tpu.vector_store %arg4[%c0_6, %c2, %c0_7], %4 {strides = array<i32>} : memref<4x24x128xf32, #tpu.memory_space<vmem>>, vector<4x16x2xf32>,
    %cst_8 = arith.constant 0.000000e+00 : f32
    %6 = vector.broadcast %cst_8 : f32 to vector<4x16x110xf32>
    %c0_9 = arith.constant 0 : index
    %c2_10 = arith.constant 2 : index
    %c18_11 = arith.constant 18 : index
    %7 = vector.load %arg4[%c0_9, %c2_10, %c18_11] : memref<4x24x128xf32, #tpu.memory_space<vmem>>, vector<4x16x110xf32>
    tpu.vector_store %arg4[%c0_9, %c2_10, %c18_11], %6 {strides = array<i32>} : memref<4x24x128xf32, #tpu.memory_space<vmem>>, vector<4x16x110xf32>,
    %c0_12 = arith.constant 0 : index
    %c0_13 = arith.constant 0 : index
    %c0_14 = arith.constant 0 : index
    %c0_15 = arith.constant 0 : index
    %8 = vector.load %arg2[%c0_12, %c0_13, %c0_14, %c0_15] : memref<1x4x16x16xf32, #tpu.memory_space<vmem>>, vector<1x4x16x16xf32>
    %9 = vector.shape_cast %8 : vector<1x4x16x16xf32> to vector<4x16x16xf32>
    %c0_16 = arith.constant 0 : index
    %c2_17 = arith.constant 2 : index
    %c2_18 = arith.constant 2 : index
    %10 = vector.load %arg4[%c0_16, %c2_17, %c2_18] : memref<4x24x128xf32, #tpu.memory_space<vmem>>, vector<4x16x16xf32>
    tpu.vector_store %arg4[%c0_16, %c2_17, %c2_18], %9 {strides = array<i32>} : memref<4x24x128xf32, #tpu.memory_space<vmem>>, vector<4x16x16xf32>,
    %c0_19 = arith.constant 0 : index
    %c0_20 = arith.constant 0 : index
    %c0_21 = arith.constant 0 : index
    %11 = vector.load %arg4[%c0_19, %c0_20, %c0_21] : memref<4x24x128xf32, #tpu.memory_space<vmem>>, vector<4x24x128xf32>
    %12 = vector.shape_cast %11 : vector<4x24x128xf32> to vector<96x128xf32>
    %cst_22 = arith.constant 1.250000e-01 : f32
    %13 = vector.broadcast %cst_22 : f32 to vector<96x128xf32>
    %14 = arith.mulf %13, %12 : vector<96x128xf32>
    %c127_i32 = arith.constant 127 : i32
    %15 = tpu.dynamic_rotate %12 by %c127_i32 dim 1 : vector<96x128xf32>, i32 -> vector<96x128xf32>
    %cst_23 = arith.constant 3.750000e-01 : f32
    %16 = vector.broadcast %cst_23 : f32 to vector<96x128xf32>
    %17 = arith.mulf %16, %15 : vector<96x128xf32>
    %18 = arith.addf %14, %17 : vector<96x128xf32>
    %c126_i32 = arith.constant 126 : i32
    %19 = tpu.dynamic_rotate %12 by %c126_i32 dim 1 : vector<96x128xf32>, i32 -> vector<96x128xf32>
    %cst_24 = arith.constant 3.750000e-01 : f32
    %20 = vector.broadcast %cst_24 : f32 to vector<96x128xf32>
    %21 = arith.mulf %20, %19 : vector<96x128xf32>
    %22 = arith.addf %18, %21 : vector<96x128xf32>
    %c125_i32 = arith.constant 125 : i32
    %23 = tpu.dynamic_rotate %12 by %c125_i32 dim 1 : vector<96x128xf32>, i32 -> vector<96x128xf32>
    %cst_25 = arith.constant 1.250000e-01 : f32
    %24 = vector.broadcast %cst_25 : f32 to vector<96x128xf32>
    %25 = arith.mulf %24, %23 : vector<96x128xf32>
    %26 = arith.addf %22, %25 : vector<96x128xf32>
    %cst_26 = arith.constant 1.250000e-01 : f32
    %27 = vector.broadcast %cst_26 : f32 to vector<96x128xf32>
    %28 = arith.mulf %27, %26 : vector<96x128xf32>
    %c95_i32 = arith.constant 95 : i32
    %29 = tpu.dynamic_rotate %26 by %c95_i32 dim 0 : vector<96x128xf32>, i32 -> vector<96x128xf32>
    %cst_27 = arith.constant 3.750000e-01 : f32
    %30 = vector.broadcast %cst_27 : f32 to vector<96x128xf32>
    %31 = arith.mulf %30, %29 : vector<96x128xf32>
    %32 = arith.addf %28, %31 : vector<96x128xf32>
    %c94_i32 = arith.constant 94 : i32
    %33 = tpu.dynamic_rotate %26 by %c94_i32 dim 0 : vector<96x128xf32>, i32 -> vector<96x128xf32>
    %cst_28 = arith.constant 3.750000e-01 : f32
    %34 = vector.broadcast %cst_28 : f32 to vector<96x128xf32>
    %35 = arith.mulf %34, %33 : vector<96x128xf32>
    %36 = arith.addf %32, %35 : vector<96x128xf32>
    %c93_i32 = arith.constant 93 : i32
    %37 = tpu.dynamic_rotate %26 by %c93_i32 dim 0 : vector<96x128xf32>, i32 -> vector<96x128xf32>
    %cst_29 = arith.constant 1.250000e-01 : f32
    %38 = vector.broadcast %cst_29 : f32 to vector<96x128xf32>
    %39 = arith.mulf %38, %37 : vector<96x128xf32>
    %40 = arith.addf %36, %39 : vector<96x128xf32>
    %41 = vector.shape_cast %40 : vector<96x128xf32> to vector<4x24x128xf32>
    %42 = vector.extract_strided_slice %41 {offsets = [0, 0, 0], sizes = [4, 16, 16], strides = [1, 1, 1]} : vector<4x24x128xf32> to vector<4x16x16xf32>
    %c0_30 = arith.constant 0 : index
    %c0_31 = arith.constant 0 : index
    %c0_32 = arith.constant 0 : index
    %c0_33 = arith.constant 0 : index
    %43 = vector.load %arg3[%c0_30, %c0_31, %c0_32, %c0_33] : memref<1x4x16x16xf32, #tpu.memory_space<vmem>>, vector<1x4x16x16xf32>
    %44 = vector.shape_cast %43 : vector<1x4x16x16xf32> to vector<4x16x16xf32>
    %45 = vector.shape_cast %42 : vector<4x16x16xf32> to vector<1x4x16x16xf32>
    tpu.vector_store %arg3[%c0_30, %c0_31, %c0_32, %c0_33], %45 {strides = array<i32>} : memref<1x4x16x16xf32, #tpu.memory_space<vmem>>, vector<1x4x16x16xf32>,
    return
  }
  func.func @transform_0(%arg0: i32, %arg1: i32) -> (i32, i32, i32, i32) {
    %c0_i32 = arith.constant 0 : i32
    %c0_i32_0 = arith.constant 0 : i32
    %c0_i32_1 = arith.constant 0 : i32
    return %arg0, %arg1, %c0_i32, %c0_i32_0 : i32, i32, i32, i32
  }
  func.func @transform_1(%arg0: i32, %arg1: i32) -> (i32, i32, i32, i32) {
    %c0_i32 = arith.constant 0 : i32
    %c0_i32_0 = arith.constant 0 : i32
    %c0_i32_1 = arith.constant 0 : i32
    return %arg0, %arg1, %c0_i32, %c0_i32_0 : i32, i32, i32, i32
  }
}

</mosaic_0001>

<llo_original>
// kernel: tpu_custom_call.1
$region0: #{tpu_custom_call.1}
  #allocation0 [shape = 'u32[]', space=smem, size = 0x4, offset = 0x4, fixed_abs, tag = 'smem constant byte address 0x4 - core index']
  #allocation1 [shape = 'u32[144,128]{1,0:T(1,128)}', space=vmem, size = 0x12000, scoped, tag = 'internal scratch']
  #allocation2 [shape = 'f32[4,24,128]{2,1,0:T(8,128)}', space=vmem, size = 0xc000, scoped, tag = 'scratch operand']
  %s0 = inlined_call_operand.hbm [shape: f32[2,4,16,16], index: 0, kind: input, shape index: {}]
  %s1 = inlined_call_operand.hbm [shape: f32[2,4,16,16], index: 1, kind: output, shape index: {}]
  %s2 = sld [smem:[#allocation0]]
  $region41: #{tpu_custom_call.1} parent=0
    _
  %s4 = ssub.s32 1, %s2
  %s5 = scalar_select 0, %s4, %s2
  $region1: #{tpu_custom_call.1} parent=0
    #allocation3 [shape = 'u8[65536]{0}', space=vmem, size = 0x10000, scoped, tag = 'input window, operand 0']
    #allocation4 [shape = 's32[2]{0}', space=sflag, size = 0x8, scoped, tag = 'scoped memory for tpu_custom_call.1']
    #allocation5 [shape = 's32[2]{0}', space=sflag, size = 0x8, scoped, tag = 'scoped memory for tpu_custom_call.1']
    #allocation6 [shape = 'u8[65536]{0}', space=vmem, size = 0x10000, scoped, tag = 'output window, operand 0']
    %6 = vsyncpa [#allocation4], 0
    %s7 = scalar_lea.sflag [#allocation4], 1
    %8 = vsyncpa %s7, 0
    %9 = vsyncpa [#allocation5], 0
    %s10 = scalar_lea.sflag [#allocation5], 1
    %11 = vsyncpa %s10, 0
    loop: start=0, step=1, limit=4
    $region2: #{tpu_custom_call.1} parent=1 // loop_pre_header
      _
    $region3: #{tpu_custom_call.1} parent=1 // loop_header
      %s13 = sphi 0, %s17
      %p14 = scmp.ge.s32.totalorder %s13, 4
      %s20 = sphi 0, %s32
      %s21 = sphi 0, %s28
      %s22 = sphi 0, %s20
      %s23 = sphi 0, %s21
      %s24 = sphi 0, %s22
      %s25 = sphi 0, %s23
      %s37 = sphi 0, %s39
      %s40 = sphi 0, %s37
      %s41 = sphi 0, %s40
      %s57 = sphi 0, %s41
      %s65 = sphi 0, %s67
      %s68 = sphi 0, %s65
      %s69 = sphi 0, %s68
      %s85 = sphi 0, %s69
    $region4: #{tpu_custom_call.1} parent=1 // loop_header_branch
      %16 = sbr.rel (%p14) target = $region8
    $region5: #{tpu_custom_call.1} parent=1 // loop_body
      %s18 = ssub.s32 %s13, 1
      %s19 = ssub.s32 %s13, 2
      %s26 = sadd.s32 1, %s21
      %p27 = scmp.ge.s32.totalorder %s26, 1
      %s28 = scalar_select %p27, 0, %s26
      %s29 = sadd.s32 1, %s20
      %s30 = scalar_select %p27, %s29, %s20
      %p31 = scmp.ge.s32.totalorder %s30, 2
      %s32 = scalar_select %p31, 0, %s30
      %s33 = ssub.s32 %s20, %s32
      %s34 = ssub.s32 %s21, %s28
      %s35 = sor.u32 %s33, %s34
      %p36 = scmp.eq.s32.totalorder %s35, 0
      %s38 = sadd.s32 %s37, 1
      %s39 = scalar_select %p36, %s37, %s38
      %p42 = pneg %p36
      %p43 = scmp.eq.s32.totalorder %s13, 1
      %p44 = por %p42, %p43
      %p45 = scmp.ne.s32.totalorder %s37, %s40
      %p46 = scmp.eq.s32.totalorder %s13, 0
      %p47 = por %p45, %p46
      %p48 = scmp.ne.s32.totalorder %s37, %s40
      %p49 = scmp.eq.s32.totalorder %s18, 1
      %p50 = por %p48, %p49
      %p51 = scmp.ne.s32.totalorder %s40, %s41
      %p52 = scmp.eq.s32.totalorder %s18, 0
      %p53 = por %p51, %p52
      %p54 = scmp.ne.s32.totalorder %s40, %s41
      %p55 = scmp.eq.s32.totalorder %s19, 1
      %p56 = por %p54, %p55
      %p58 = scmp.ne.s32.totalorder %s41, %s57
      %p59 = scmp.eq.s32.totalorder %s19, 0
      %p60 = por %p58, %p59
      %s61 = ssub.s32 %s20, %s32
      %s62 = ssub.s32 %s21, %s28
      %s63 = sor.u32 %s61, %s62
      %p64 = scmp.eq.s32.totalorder %s63, 0
      %s66 = sadd.s32 %s65, 1
      %s67 = scalar_select %p64, %s65, %s66
      %p70 = pneg %p64
      %p71 = scmp.eq.s32.totalorder %s13, 1
      %p72 = por %p70, %p71
      %p73 = scmp.ne.s32.totalorder %s65, %s68
      %p74 = scmp.eq.s32.totalorder %s13, 0
      %p75 = por %p73, %p74
      %p76 = scmp.ne.s32.totalorder %s65, %s68
      %p77 = scmp.eq.s32.totalorder %s18, 1
      %p78 = por %p76, %p77
      %p79 = scmp.ne.s32.totalorder %s68, %s69
      %p80 = scmp.eq.s32.totalorder %s18, 0
      %p81 = por %p79, %p80
      %p82 = scmp.ne.s32.totalorder %s68, %s69
      %p83 = scmp.eq.s32.totalorder %s19, 1
      %p84 = por %p82, %p83
      %p86 = scmp.ne.s32.totalorder %s69, %s85
      %p87 = scmp.eq.s32.totalorder %s19, 0
      %p88 = por %p86, %p87
      %p89 = scmp.le.s32.totalorder 1, %s13
      %p90 = scmp.lt.s32.totalorder %s13, 3
      %p91 = pnand %p89, %p90
      %p92 = pneg %p91
      // Predicated region
      $region9: #{tpu_custom_call.1} parent=5 // pred_check
        _
      $region10: #{tpu_custom_call.1} parent=5 // pred_check_branch
        %94 = sbr.rel (%p91) target = $region12
      $region11: #{tpu_custom_call.1} parent=5 // pred_region
        %s95 = ssub.s32 %s13, 1
      $region12: #{tpu_custom_call.1} parent=5 // pred_fallthru
        _
      %p96 = scmp.lt.s32.totalorder %s13, 2
      // Predicated region
      $region13: #{tpu_custom_call.1} parent=5 // pred_check
        %p97 = pneg %p96
      $region14: #{tpu_custom_call.1} parent=5 // pred_check_branch
        %99 = sbr.rel (%p97) target = $region16
      $region15: #{tpu_custom_call.1} parent=5 // pred_region
        // Predicated region
        $region17: #{tpu_custom_call.1} parent=15 // pred_check
          %p100 = pneg %p47
        $region18: #{tpu_custom_call.1} parent=15 // pred_check_branch
          %102 = sbr.rel (%p100) target = $region20
        $region19: #{tpu_custom_call.1} parent=15 // pred_region
          %s103 = sand.u32 %s37, 1
          %s104 = scalar_lea.sflag [#allocation4], %s103
          %s105 = sand.u32 %s37, 1
          %s106 = smul.addr %s105, 64
          %s107 = scalar_lea.vmem [#allocation3], %s106
          %s108 = smul.u32 4, %s21
          %s110 = ssub.s32 1024, 1024
          %111 = vsyncadd %s104, %s110
          %s112 = smul.addr %s108, 2
          %s113 = smul.addr %s20, 8
          %s114 = sadd.s32 %s112, %s113
          %s115 = smul.addr %s114, 128
          %s116 = scalar_lea.hbm %s0, %s115
          %s117 = sshll.u32 %s107, 4
          %s118 = int_to_ptr.vmem [resolvable:$true] %s117
          %123 = dma.hbm_to_vmem [thread:$0]  %s116, 1024, %s118, %s104, 128, 128, 8
        $region20: #{tpu_custom_call.1} parent=15 // pred_fallthru
          _
      $region16: #{tpu_custom_call.1} parent=5 // pred_fallthru
        _
      %p124 = scmp.le.s32.totalorder 1, %s13
      %p125 = scmp.lt.s32.totalorder %s13, 3
      %p126 = pnand %p124, %p125
      %p127 = pneg %p126
      // Predicated region
      $region21: #{tpu_custom_call.1} parent=5 // pred_check
        _
      $region22: #{tpu_custom_call.1} parent=5 // pred_check_branch
        %129 = sbr.rel (%p126) target = $region24
      $region23: #{tpu_custom_call.1} parent=5 // pred_region
        %s130 = ssub.s32 %s13, 1
        %s131 = sand.u32 %s40, 1
        %s132 = scalar_lea.sflag [#allocation4], %s131
        %s133 = sand.u32 %s40, 1
        %s134 = smul.addr %s133, 64
        %s135 = scalar_lea.vmem [#allocation3], %s134
        // Predicated region
        $region25: #{tpu_custom_call.1} parent=23 // pred_check
          %p136 = pneg %p53
        $region26: #{tpu_custom_call.1} parent=23 // pred_check_branch
          %138 = sbr.rel (%p136) target = $region28
        $region27: #{tpu_custom_call.1} parent=23 // pred_region
          %139 = dma.done %s132, 1024
        $region28: #{tpu_custom_call.1} parent=23 // pred_fallthru
          _
        %s140 = sand.u32 %s40, 1
        %s141 = scalar_lea.sflag [#allocation4], %s140
        %s142 = sand.u32 %s40, 1
        %s143 = smul.addr %s142, 64
        %s144 = scalar_lea.vmem [#allocation3], %s143
        %p145 = pneg %p53
        %p146 = pneg %p50
        %p147 = pneg %p81
        %p148 = pneg %p78
        %s149 = sand.u32 %s68, 1
        %s150 = scalar_lea.sflag [#allocation5], %s149
        %s151 = sand.u32 %s68, 1
        %s152 = smul.addr %s151, 64
        %s153 = scalar_lea.vmem [#allocation6], %s152
        %s154 = smul.u32 4, %s23
        %s155 = smul.u32 4, %s23
        %156 = vst [vmem:[#allocation2] sm:$0x3] 0.0
        %157 = vst [vmem:[#allocation2 + $0x18] sm:$0x3] 0.0
        %158 = vst [vmem:[#allocation2 + $0x30] sm:$0x3] 0.0
        %159 = vst [vmem:[#allocation2 + $0x48] sm:$0x3] 0.0
        %160 = vst [vmem:[#allocation2 + $0x12] sm:$0x3f] 0.0
        %161 = vst [vmem:[#allocation2 + $0x2a] sm:$0x3f] 0.0
        %162 = vst [vmem:[#allocation2 + $0x42] sm:$0x3f] 0.0
        %163 = vst [vmem:[#allocation2 + $0x5a] sm:$0x3f] 0.0
        %vm164 = vcmask 15360
        %165 = vst.msk [vmem:[#allocation2 + $0x2] sm:$0xff] %vm164, 0.0
        %166 = vst.msk [vmem:[#allocation2 + $0xa] sm:$0xff] %vm164, 0.0
        %167 = vst.msk [vmem:[#allocation2 + $0x1a] sm:$0xff] %vm164, 0.0
        %168 = vst.msk [vmem:[#allocation2 + $0x22] sm:$0xff] %vm164, 0.0
        %169 = vst.msk [vmem:[#allocation2 + $0x32] sm:$0xff] %vm164, 0.0
        %170 = vst.msk [vmem:[#allocation2 + $0x3a] sm:$0xff] %vm164, 0.0
        %171 = vst.msk [vmem:[#allocation2 + $0x4a] sm:$0xff] %vm164, 0.0
        %172 = vst.msk [vmem:[#allocation2 + $0x52] sm:$0xff] %vm164, 0.0
        %vm173 = vcmask 1047696
        %174 = vst.msk [vmem:[#allocation2 + $0x2] sm:$0xff] %vm173, 0.0
        %175 = vst.msk [vmem:[#allocation2 + $0xa] sm:$0xff] %vm173, 0.0
        %176 = vst.msk [vmem:[#allocation2 + $0x1a] sm:$0xff] %vm173, 0.0
        %177 = vst.msk [vmem:[#allocation2 + $0x22] sm:$0xff] %vm173, 0.0
        %178 = vst.msk [vmem:[#allocation2 + $0x32] sm:$0xff] %vm173, 0.0
        %179 = vst.msk [vmem:[#allocation2 + $0x3a] sm:$0xff] %vm173, 0.0
        %180 = vst.msk [vmem:[#allocation2 + $0x4a] sm:$0xff] %vm173, 0.0
        %181 = vst.msk [vmem:[#allocation2 + $0x52] sm:$0xff] %vm173, 0.0
        %v182 = vld [vmem:[%s135] sm:$0xff]
        %v183 = vld [vmem:[%s135 + $0x8] sm:$0xff]
        %v184 = vld [vmem:[%s135 + $0x10] sm:$0xff]
        %v185 = vld [vmem:[%s135 + $0x18] sm:$0xff]
        %v186 = vld [vmem:[%s135 + $0x20] sm:$0xff]
        %v187 = vld [vmem:[%s135 + $0x28] sm:$0xff]
        %v188 = vld [vmem:[%s135 + $0x30] sm:$0xff]
        %v189 = vld [vmem:[%s135 + $0x38] sm:$0xff]
        %198 = vrot.lane.b32.xlu0 %v182, 2
        %v199 = vpop.permute.xlu0 %198
        %200 = vrot.lane.b32.xlu0 %v183, 2
        %v201 = vpop.permute.xlu0 %200
        %202 = vrot.lane.b32.xlu0 %v184, 2
        %v203 = vpop.permute.xlu0 %202
        %204 = vrot.lane.b32.xlu0 %v185, 2
        %v205 = vpop.permute.xlu0 %204
        %206 = vrot.lane.b32.xlu0 %v186, 2
        %v207 = vpop.permute.xlu0 %206
        %208 = vrot.lane.b32.xlu0 %v187, 2
        %v209 = vpop.permute.xlu0 %208
        %210 = vrot.lane.b32.xlu0 %v188, 2
        %v211 = vpop.permute.xlu0 %210
        %212 = vrot.lane.b32.xlu0 %v189, 2
        %v213 = vpop.permute.xlu0 %212
        %vm222 = vcmask 146448
        %223 = vst.msk [vmem:[#allocation2 + $0x2] sm:$0xff] %vm222, %v199
        %224 = vst.msk [vmem:[#allocation2 + $0xa] sm:$0xff] %vm222, %v201
        %225 = vst.msk [vmem:[#allocation2 + $0x1a] sm:$0xff] %vm222, %v203
        %226 = vst.msk [vmem:[#allocation2 + $0x22] sm:$0xff] %vm222, %v205
        %227 = vst.msk [vmem:[#allocation2 + $0x32] sm:$0xff] %vm222, %v207
        %228 = vst.msk [vmem:[#allocation2 + $0x3a] sm:$0xff] %vm222, %v209
        %229 = vst.msk [vmem:[#allocation2 + $0x4a] sm:$0xff] %vm222, %v211
        %230 = vst.msk [vmem:[#allocation2 + $0x52] sm:$0xff] %vm222, %v213
        %v231 = vld [vmem:[#allocation2] sm:$0xff]
        %v232 = vld [vmem:[#allocation2 + $0x8] sm:$0xff]
        %v233 = vld [vmem:[#allocation2 + $0x10] sm:$0xff]
        %v234 = vld [vmem:[#allocation2 + $0x18] sm:$0xff]
        %v235 = vld [vmem:[#allocation2 + $0x20] sm:$0xff]
        %v236 = vld [vmem:[#allocation2 + $0x28] sm:$0xff]
        %v237 = vld [vmem:[#allocation2 + $0x30] sm:$0xff]
        %v238 = vld [vmem:[#allocation2 + $0x38] sm:$0xff]
        %v239 = vld [vmem:[#allocation2 + $0x40] sm:$0xff]
        %v240 = vld [vmem:[#allocation2 + $0x48] sm:$0xff]
        %v241 = vld [vmem:[#allocation2 + $0x50] sm:$0xff]
        %v242 = vld [vmem:[#allocation2 + $0x58] sm:$0xff]
        %v243 = vmul.f32 %v231, 0.125
        %v244 = vmul.f32 %v232, 0.125
        %v245 = vmul.f32 %v233, 0.125
        %v246 = vmul.f32 %v234, 0.125
        %v247 = vmul.f32 %v235, 0.125
        %v248 = vmul.f32 %v236, 0.125
        %v249 = vmul.f32 %v237, 0.125
        %v250 = vmul.f32 %v238, 0.125
        %v251 = vmul.f32 %v239, 0.125
        %v252 = vmul.f32 %v240, 0.125
        %v253 = vmul.f32 %v241, 0.125
        %v254 = vmul.f32 %v242, 0.125
        %255 = vrot.lane.b32.xlu0 %v231, 127
        %v256 = vpop.permute.xlu0 %255
        %257 = vrot.lane.b32.xlu0 %v232, 127
        %v258 = vpop.permute.xlu0 %257
        %259 = vrot.lane.b32.xlu0 %v233, 127
        %v260 = vpop.permute.xlu0 %259
        %261 = vrot.lane.b32.xlu0 %v234, 127
        %v262 = vpop.permute.xlu0 %261
        %263 = vrot.lane.b32.xlu0 %v235, 127
        %v264 = vpop.permute.xlu0 %263
        %265 = vrot.lane.b32.xlu0 %v236, 127
        %v266 = vpop.permute.xlu0 %265
        %267 = vrot.lane.b32.xlu0 %v237, 127
        %v268 = vpop.permute.xlu0 %267
        %269 = vrot.lane.b32.xlu0 %v238, 127
        %v270 = vpop.permute.xlu0 %269
        %271 = vrot.lane.b32.xlu0 %v239, 127
        %v272 = vpop.permute.xlu0 %271
        %273 = vrot.lane.b32.xlu0 %v240, 127
        %v274 = vpop.permute.xlu0 %273
        %275 = vrot.lane.b32.xlu0 %v241, 127
        %v276 = vpop.permute.xlu0 %275
        %277 = vrot.lane.b32.xlu0 %v242, 127
        %v278 = vpop.permute.xlu0 %277
        %v279 = vmul.f32 %v256, 0.375
        %v280 = vmul.f32 %v258, 0.375
        %v281 = vmul.f32 %v260, 0.375
        %v282 = vmul.f32 %v262, 0.375
        %v283 = vmul.f32 %v264, 0.375
        %v284 = vmul.f32 %v266, 0.375
        %v285 = vmul.f32 %v268, 0.375
        %v286 = vmul.f32 %v270, 0.375
        %v287 = vmul.f32 %v272, 0.375
        %v288 = vmul.f32 %v274, 0.375
        %v289 = vmul.f32 %v276, 0.375
        %v290 = vmul.f32 %v278, 0.375
        %v291 = vadd.f32 %v243, %v279
        %v292 = vadd.f32 %v244, %v280
        %v293 = vadd.f32 %v245, %v281
        %v294 = vadd.f32 %v246, %v282
        %v295 = vadd.f32 %v247, %v283
        %v296 = vadd.f32 %v248, %v284
        %v297 = vadd.f32 %v249, %v285
        %v298 = vadd.f32 %v250, %v286
        %v299 = vadd.f32 %v251, %v287
        %v300 = vadd.f32 %v252, %v288
        %v301 = vadd.f32 %v253, %v289
        %v302 = vadd.f32 %v254, %v290
        %303 = vrot.lane.b32.xlu0 %v231, 126
        %v304 = vpop.permute.xlu0 %303
        %305 = vrot.lane.b32.xlu0 %v232, 126
        %v306 = vpop.permute.xlu0 %305
        %307 = vrot.lane.b32.xlu0 %v233, 126
        %v308 = vpop.permute.xlu0 %307
        %309 = vrot.lane.b32.xlu0 %v234, 126
        %v310 = vpop.permute.xlu0 %309
        %311 = vrot.lane.b32.xlu0 %v235, 126
        %v312 = vpop.permute.xlu0 %311
        %313 = vrot.lane.b32.xlu0 %v236, 126
        %v314 = vpop.permute.xlu0 %313
        %315 = vrot.lane.b32.xlu0 %v237, 126
        %v316 = vpop.permute.xlu0 %315
        %317 = vrot.lane.b32.xlu0 %v238, 126
        %v318 = vpop.permute.xlu0 %317
        %319 = vrot.lane.b32.xlu0 %v239, 126
        %v320 = vpop.permute.xlu0 %319
        %321 = vrot.lane.b32.xlu0 %v240, 126
        %v322 = vpop.permute.xlu0 %321
        %323 = vrot.lane.b32.xlu0 %v241, 126
        %v324 = vpop.permute.xlu0 %323
        %325 = vrot.lane.b32.xlu0 %v242, 126
        %v326 = vpop.permute.xlu0 %325
        %v327 = vmul.f32 %v304, 0.375
        %v328 = vmul.f32 %v306, 0.375
        %v329 = vmul.f32 %v308, 0.375
        %v330 = vmul.f32 %v310, 0.375
        %v331 = vmul.f32 %v312, 0.375
        %v332 = vmul.f32 %v314, 0.375
        %v333 = vmul.f32 %v316, 0.375
        %v334 = vmul.f32 %v318, 0.375
        %v335 = vmul.f32 %v320, 0.375
        %v336 = vmul.f32 %v322, 0.375
        %v337 = vmul.f32 %v324, 0.375
        %v338 = vmul.f32 %v326, 0.375
        %v339 = vadd.f32 %v291, %v327
        %v340 = vadd.f32 %v292, %v328
        %v341 = vadd.f32 %v293, %v329
        %v342 = vadd.f32 %v294, %v330
        %v343 = vadd.f32 %v295, %v331
        %v344 = vadd.f32 %v296, %v332
        %v345 = vadd.f32 %v297, %v333
        %v346 = vadd.f32 %v298, %v334
        %v347 = vadd.f32 %v299, %v335
        %v348 = vadd.f32 %v300, %v336
        %v349 = vadd.f32 %v301, %v337
        %v350 = vadd.f32 %v302, %v338
        %351 = vrot.lane.b32.xlu0 %v231, 125
        %v352 = vpop.permute.xlu0 %351
        %353 = vrot.lane.b32.xlu0 %v232, 125
        %v354 = vpop.permute.xlu0 %353
        %355 = vrot.lane.b32.xlu0 %v233, 125
        %v356 = vpop.permute.xlu0 %355
        %357 = vrot.lane.b32.xlu0 %v234, 125
        %v358 = vpop.permute.xlu0 %357
        %359 = vrot.lane.b32.xlu0 %v235, 125
        %v360 = vpop.permute.xlu0 %359
        %361 = vrot.lane.b32.xlu0 %v236, 125
        %v362 = vpop.permute.xlu0 %361
        %363 = vrot.lane.b32.xlu0 %v237, 125
        %v364 = vpop.permute.xlu0 %363
        %365 = vrot.lane.b32.xlu0 %v238, 125
        %v366 = vpop.permute.xlu0 %365
        %367 = vrot.lane.b32.xlu0 %v239, 125
        %v368 = vpop.permute.xlu0 %367
        %369 = vrot.lane.b32.xlu0 %v240, 125
        %v370 = vpop.permute.xlu0 %369
        %371 = vrot.lane.b32.xlu0 %v241, 125
        %v372 = vpop.permute.xlu0 %371
        %373 = vrot.lane.b32.xlu0 %v242, 125
        %v374 = vpop.permute.xlu0 %373
        %v375 = vmul.f32 %v352, 0.125
        %v376 = vmul.f32 %v354, 0.125
        %v377 = vmul.f32 %v356, 0.125
        %v378 = vmul.f32 %v358, 0.125
        %v379 = vmul.f32 %v360, 0.125
        %v380 = vmul.f32 %v362, 0.125
        %v381 = vmul.f32 %v364, 0.125
        %v382 = vmul.f32 %v366, 0.125
        %v383 = vmul.f32 %v368, 0.125
        %v384 = vmul.f32 %v370, 0.125
        %v385 = vmul.f32 %v372, 0.125
        %v386 = vmul.f32 %v374, 0.125
        %v387 = vadd.f32 %v339, %v375
        %v388 = vadd.f32 %v340, %v376
        %v389 = vadd.f32 %v341, %v377
        %v390 = vadd.f32 %v342, %v378
        %v391 = vadd.f32 %v343, %v379
        %v392 = vadd.f32 %v344, %v380
        %v393 = vadd.f32 %v345, %v381
        %v394 = vadd.f32 %v346, %v382
        %v395 = vadd.f32 %v347, %v383
        %v396 = vadd.f32 %v348, %v384
        %v397 = vadd.f32 %v349, %v385
        %v398 = vadd.f32 %v350, %v386
        %v399 = vmul.f32 %v387, 0.125
        %v400 = vmul.f32 %v388, 0.125
        %v401 = vmul.f32 %v390, 0.125
        %v402 = vmul.f32 %v391, 0.125
        %v403 = vmul.f32 %v393, 0.125
        %v404 = vmul.f32 %v394, 0.125
        %v405 = vmul.f32 %v396, 0.125
        %v406 = vmul.f32 %v397, 0.125
        %v407 = vrot.slane %v387, 1
        %v408 = vrot.slane %v388, 1
        %v409 = vrot.slane %v389, 1
        %v410 = vrot.slane %v390, 1
        %v411 = vrot.slane %v391, 1
        %v412 = vrot.slane %v392, 1
        %v413 = vrot.slane %v393, 1
        %v414 = vrot.slane %v394, 1
        %v415 = vrot.slane %v395, 1
        %v416 = vrot.slane %v396, 1
        %v417 = vrot.slane %v397, 1
        %v418 = vrot.slane %v398, 1
        %v419 = vlaneseq
        %v420 = vshrl.u32 %v419, 7
        %vm421 = vcmp.lt.s32.totalorder %v420, 7
        %v422 = vsel %vm421, %v417, %v418
        %v423 = vsel %vm421, %v416, %v417
        %v424 = vsel %vm421, %v414, %v415
        %v425 = vsel %vm421, %v413, %v414
        %v426 = vsel %vm421, %v411, %v412
        %v427 = vsel %vm421, %v410, %v411
        %v428 = vsel %vm421, %v408, %v409
        %v429 = vsel %vm421, %v407, %v408
        %v430 = vmul.f32 %v429, 0.375
        %v431 = vmul.f32 %v428, 0.375
        %v432 = vmul.f32 %v427, 0.375
        %v433 = vmul.f32 %v426, 0.375
        %v434 = vmul.f32 %v425, 0.375
        %v435 = vmul.f32 %v424, 0.375
        %v436 = vmul.f32 %v423, 0.375
        %v437 = vmul.f32 %v422, 0.375
        %v438 = vadd.f32 %v399, %v430
        %v439 = vadd.f32 %v400, %v431
        %v440 = vadd.f32 %v401, %v432
        %v441 = vadd.f32 %v402, %v433
        %v442 = vadd.f32 %v403, %v434
        %v443 = vadd.f32 %v404, %v435
        %v444 = vadd.f32 %v405, %v436
        %v445 = vadd.f32 %v406, %v437
        %v446 = vrot.slane %v387, 2
        %v447 = vrot.slane %v388, 2
        %v448 = vrot.slane %v389, 2
        %v449 = vrot.slane %v390, 2
        %v450 = vrot.slane %v391, 2
        %v451 = vrot.slane %v392, 2
        %v452 = vrot.slane %v393, 2
        %v453 = vrot.slane %v394, 2
        %v454 = vrot.slane %v395, 2
        %v455 = vrot.slane %v396, 2
        %v456 = vrot.slane %v397, 2
        %v457 = vrot.slane %v398, 2
        %vm458 = vcmp.lt.s32.totalorder %v420, 6
        %v459 = vsel %vm458, %v456, %v457
        %v460 = vsel %vm458, %v455, %v456
        %v461 = vsel %vm458, %v453, %v454
        %v462 = vsel %vm458, %v452, %v453
        %v463 = vsel %vm458, %v450, %v451
        %v464 = vsel %vm458, %v449, %v450
        %v465 = vsel %vm458, %v447, %v448
        %v466 = vsel %vm458, %v446, %v447
        %v467 = vmul.f32 %v466, 0.375
        %v468 = vmul.f32 %v465, 0.375
        %v469 = vmul.f32 %v464, 0.375
        %v470 = vmul.f32 %v463, 0.375
        %v471 = vmul.f32 %v462, 0.375
        %v472 = vmul.f32 %v461, 0.375
        %v473 = vmul.f32 %v460, 0.375
        %v474 = vmul.f32 %v459, 0.375
        %v475 = vadd.f32 %v438, %v467
        %v476 = vadd.f32 %v439, %v468
        %v477 = vadd.f32 %v440, %v469
        %v478 = vadd.f32 %v441, %v470
        %v479 = vadd.f32 %v442, %v471
        %v480 = vadd.f32 %v443, %v472
        %v481 = vadd.f32 %v444, %v473
        %v482 = vadd.f32 %v445, %v474
        %v483 = vrot.slane %v387, 3
        %v484 = vrot.slane %v388, 3
        %v485 = vrot.slane %v389, 3
        %v486 = vrot.slane %v390, 3
        %v487 = vrot.slane %v391, 3
        %v488 = vrot.slane %v392, 3
        %v489 = vrot.slane %v393, 3
        %v490 = vrot.slane %v394, 3
        %v491 = vrot.slane %v395, 3
        %v492 = vrot.slane %v396, 3
        %v493 = vrot.slane %v397, 3
        %v494 = vrot.slane %v398, 3
        %vm495 = vcmp.lt.s32.totalorder %v420, 5
        %v496 = vsel %vm495, %v493, %v494
        %v497 = vsel %vm495, %v492, %v493
        %v498 = vsel %vm495, %v490, %v491
        %v499 = vsel %vm495, %v489, %v490
        %v500 = vsel %vm495, %v487, %v488
        %v501 = vsel %vm495, %v486, %v487
        %v502 = vsel %vm495, %v484, %v485
        %v503 = vsel %vm495, %v483, %v484
        %v504 = vmul.f32 %v503, 0.125
        %v505 = vmul.f32 %v502, 0.125
        %v506 = vmul.f32 %v501, 0.125
        %v507 = vmul.f32 %v500, 0.125
        %v508 = vmul.f32 %v499, 0.125
        %v509 = vmul.f32 %v498, 0.125
        %v510 = vmul.f32 %v497, 0.125
        %v511 = vmul.f32 %v496, 0.125
        %v512 = vadd.f32 %v475, %v504
        %v513 = vadd.f32 %v476, %v505
        %v514 = vadd.f32 %v477, %v506
        %v515 = vadd.f32 %v478, %v507
        %v516 = vadd.f32 %v479, %v508
        %v517 = vadd.f32 %v480, %v509
        %v518 = vadd.f32 %v481, %v510
        %v519 = vadd.f32 %v482, %v511
        %vm520 = vcmask 130048
        %521 = vst.msk [vmem:[%s153] sm:$0xff] %vm520, %v512
        %522 = vst.msk [vmem:[%s153 + $0x8] sm:$0xff] %vm520, %v513
        %523 = vst.msk [vmem:[%s153 + $0x10] sm:$0xff] %vm520, %v514
        %524 = vst.msk [vmem:[%s153 + $0x18] sm:$0xff] %vm520, %v515
        %525 = vst.msk [vmem:[%s153 + $0x20] sm:$0xff] %vm520, %v516
        %526 = vst.msk [vmem:[%s153 + $0x28] sm:$0xff] %vm520, %v517
        %527 = vst.msk [vmem:[%s153 + $0x30] sm:$0xff] %vm520, %v518
        %528 = vst.msk [vmem:[%s153 + $0x38] sm:$0xff] %vm520, %v519
        %s529 = sand.u32 %s68, 1
        %s530 = scalar_lea.sflag [#allocation5], %s529
        %s531 = sand.u32 %s68, 1
        %s532 = smul.addr %s531, 64
        %s533 = scalar_lea.vmem [#allocation6], %s532
        // Predicated region
        $region29: #{tpu_custom_call.1} parent=23 // pred_check
          %p534 = pneg %p78
        $region30: #{tpu_custom_call.1} parent=23 // pred_check_branch
          %536 = sbr.rel (%p534) target = $region32
        $region31: #{tpu_custom_call.1} parent=23 // pred_region
          %s537 = smul.u32 4, %s23
          %s539 = ssub.s32 1024, 1024
          %540 = vsyncadd %s530, %s539
          %s541 = smul.addr %s537, 2
          %s542 = smul.addr %s22, 8
          %s543 = sadd.s32 %s541, %s542
          %s544 = smul.addr %s543, 128
          %s545 = scalar_lea.hbm %s1, %s544
          %s546 = sshll.u32 %s533, 4
          %s547 = int_to_ptr.vmem [resolvable:$true] %s546
          %552 = dma.vmem_to_hbm [thread:$0]  %s547, 1024, %s545, %s530, 128, 128, 8
        $region32: #{tpu_custom_call.1} parent=23 // pred_fallthru
          _
      $region24: #{tpu_custom_call.1} parent=5 // pred_fallthru
        _
      %p553 = scmp.le.s32.totalorder 2, %s13
      // Predicated region
      $region33: #{tpu_custom_call.1} parent=5 // pred_check
        %p554 = pneg %p553
      $region34: #{tpu_custom_call.1} parent=5 // pred_check_branch
        %556 = sbr.rel (%p554) target = $region36
      $region35: #{tpu_custom_call.1} parent=5 // pred_region
        %s557 = ssub.s32 %s13, 2
        // Predicated region
        $region37: #{tpu_custom_call.1} parent=35 // pred_check
          %p558 = pneg %p84
        $region38: #{tpu_custom_call.1} parent=35 // pred_check_branch
          %560 = sbr.rel (%p558) target = $region40
        $region39: #{tpu_custom_call.1} parent=35 // pred_region
          %s561 = sand.u32 %s69, 1
          %s562 = scalar_lea.sflag [#allocation5], %s561
          %s563 = sand.u32 %s69, 1
          %s564 = smul.addr %s563, 64
          %s565 = scalar_lea.vmem [#allocation6], %s564
          %566 = dma.done %s562, 1024
        $region40: #{tpu_custom_call.1} parent=35 // pred_fallthru
          _
      $region36: #{tpu_custom_call.1} parent=5 // pred_fallthru
        _
    $region6: #{tpu_custom_call.1} parent=1 // loop_footer
      %s17 = sadd.s32 1, %s13
    $region7: #{tpu_custom_call.1} parent=1 // loop_footer_branch
      %12 = sbr.rel target = $region3
    $region8: #{tpu_custom_call.1} parent=1 // loop_exit
      _
    %567 = vsyncpa [#allocation4], 1
    %s568 = scalar_lea.sflag [#allocation4], 1
    %569 = vsyncpa %s568, 1
    %570 = vsyncpa [#allocation5], 1
    %s571 = scalar_lea.sflag [#allocation5], 1
    %572 = vsyncpa %s571, 1

</llo_original>
